<compile_context>
chip_gen: v6e
topology: v6e:2x2x1
jax: 0.10.0
libtpu: 0.0.40
codegen_flags: <defaults>
</compile_context>

<pallas_src>
import jax
import jax.numpy as jnp
from jax.experimental import pallas as pl
from jax.experimental.pallas import tpu as pltpu

_VMEM_LIMIT = 48 * 1024 * 1024     # explicit budget: safe on v5e/v6e/v7x
_NEG_INF = -1e9
_ROW_TILE = 256                    # target-node row tile (TQ)


def _round_up(x, m):
    return (x + m - 1) // m * m


# ----------------------------------------------------------------------------
# Kernel 1: batched per-head projection  H_all = X @ W_all  (bf16 out)
# ----------------------------------------------------------------------------
def _proj_kernel(x_ref, w_ref, h_ref):
    xb = x_ref[...].astype(jnp.bfloat16)
    h = jnp.dot(xb, w_ref[...], preferred_element_type=jnp.float32)
    h_ref[...] = h.astype(jnp.bfloat16)


def _project(x, w_all, tq):
    n_pad, f_in = x.shape
    hf = w_all.shape[1]
    return pl.pallas_call(
        _proj_kernel,
        out_shape=jax.ShapeDtypeStruct((n_pad, hf), jnp.bfloat16),
        grid_spec=pltpu.PrefetchScalarGridSpec(
            num_scalar_prefetch=0,
            grid=(n_pad // tq,),
            in_specs=[
                pl.BlockSpec((tq, f_in), lambda r: (r, 0)),
                pl.BlockSpec((f_in, hf), lambda r: (0, 0)),
            ],
            out_specs=pl.BlockSpec((tq, hf), lambda r: (r, 0)),
        ),
        compiler_params=pltpu.CompilerParams(
            dimension_semantics=("parallel",),
            vmem_limit_bytes=_VMEM_LIMIT),
    )(x, w_all)


# ----------------------------------------------------------------------------
# Kernel 2: row-tiled attention + aggregation, grid = (row_tiles, heads)
# ----------------------------------------------------------------------------
def _make_attn_kernel(num_heads, tq, reduce, has_skip, act):
    def kernel(hall_ref, adst_ref, asrc_ref, bias_ref, *rest):
        if has_skip:
            skip_ref, out_ref = rest
        else:
            (out_ref,) = rest

        ridx = pl.program_id(0)
        hidx = pl.program_id(1)

        h_all = hall_ref[...]                                 # (N, F) bf16
        row0 = pl.multiple_of(ridx * tq, tq)
        h_rows = hall_ref[pl.ds(row0, tq), :]                 # (TQ, F) bf16
        a_dst = adst_ref[0]                                   # (1, F) bf16
        a_src = asrc_ref[0]                                   # (1, F) bf16

        # Attention logits (both via full-M MXU matmuls, f32 accumulation).
        ldst = jax.lax.dot_general(                           # (TQ, 1)
            h_rows, a_dst, (((1,), (1,)), ((), ())),
            preferred_element_type=jnp.float32)
        lsrc = jax.lax.dot_general(                           # (1, N)
            a_src, h_all, (((1,), (1,)), ((), ())),
            preferred_element_type=jnp.float32)

        e = ldst + lsrc                                       # (TQ, N) f32
        e = jnp.where(e > 0.0, e, 0.2 * e)                    # LeakyReLU(0.2)
        e = e + bias_ref[...]                                 # 0 / -1e9 mask
        m = jnp.max(e, axis=-1, keepdims=True)
        p = jnp.exp(e - m)                                    # unnormalized
        s = jnp.sum(p, axis=-1, keepdims=True)

        # Aggregate with unnormalized weights (bf16 MXU), normalize after.
        acc = jnp.dot(p.astype(jnp.bfloat16), h_all,
                      preferred_element_type=jnp.float32)     # (TQ, F)
        res = acc * pl.reciprocal(s, approx=True)

        if reduce == "concat":
            if has_skip:
                res = res + skip_ref[...]                     # identity skip
            if act == "elu":
                res = jnp.where(res > 0.0, res, jnp.exp(res) - 1.0)
            out_ref[...] = res
        else:  # 'avg': accumulate raw head sums, scale once at the last head.
            @pl.when(hidx == 0)
            def _():
                out_ref[...] = res

            @pl.when(hidx > 0)
            def _():
                out_ref[...] += res

            @pl.when(hidx == num_heads - 1)
            def _():
                fin = out_ref[...] * (1.0 / num_heads)
                if act == "elu":
                    fin = jnp.where(fin > 0.0, fin, jnp.exp(fin) - 1.0)
                out_ref[...] = fin

    return kernel


def gat_layer(x, bias, W, a_dst, a_src, *, reduce, act, tq, skip_x=None):
    """One GATv1 layer.  x: (N_pad, Fin) f32; bias: (N_pad, N_pad) f32;
    W: (H, Fin, Fout); a_*: (H, 1, Fout)."""
    heads, f_in, f_out = W.shape
    n_pad = x.shape[0]
    f_pad = _round_up(f_out, 128)
    hf = heads * f_pad
    pad = f_pad - f_out

    # Pad / pack weights (lane-dense, bf16 for the MXU).
    w_all = jnp.transpose(jnp.pad(W, ((0, 0), (0, 0), (0, pad))), (1, 0, 2))
    w_all = w_all.reshape(f_in, hf).astype(jnp.bfloat16)
    a_dst_p = jnp.pad(a_dst, ((0, 0), (0, 0), (0, pad))).astype(jnp.bfloat16)
    a_src_p = jnp.pad(a_src, ((0, 0), (0, 0), (0, pad))).astype(jnp.bfloat16)

    # 1) batched projection for all heads.
    h_all = _project(x.astype(jnp.float32), w_all, tq)        # (N_pad, H*Fp) bf16

    # 2) attention + aggregation, tiled over target-node rows.
    kernel = _make_attn_kernel(heads, tq, reduce, skip_x is not None, act)
    grid = (n_pad // tq, heads)

    in_specs = [
        pl.BlockSpec((n_pad, f_pad), lambda r, h: (0, h)),     # H slab (head h)
        pl.BlockSpec((1, 1, f_pad), lambda r, h: (h, 0, 0)),   # a_dst
        pl.BlockSpec((1, 1, f_pad), lambda r, h: (h, 0, 0)),   # a_src
        pl.BlockSpec((tq, n_pad), lambda r, h: (r, 0)),        # bias rows
    ]
    inputs = [h_all, a_dst_p, a_src_p, bias]
    if skip_x is not None:
        in_specs.append(pl.BlockSpec((tq, f_pad), lambda r, h: (r, h)))
        inputs.append(skip_x.astype(jnp.float32))

    if reduce == "concat":
        out_shape = jax.ShapeDtypeStruct((n_pad, hf), jnp.float32)
        out_spec = pl.BlockSpec((tq, f_pad), lambda r, h: (r, h))
        dims = ("parallel", "parallel")      # heads independent -> megacore ok
    else:  # 'avg'
        out_shape = jax.ShapeDtypeStruct((n_pad, f_pad), jnp.float32)
        out_spec = pl.BlockSpec((tq, f_pad), lambda r, h: (r, 0))
        dims = ("parallel", "arbitrary")     # heads accumulate -> not parallel

    return pl.pallas_call(
        kernel,
        out_shape=out_shape,
        grid_spec=pltpu.PrefetchScalarGridSpec(
            num_scalar_prefetch=0,
            grid=grid,
            in_specs=in_specs,
            out_specs=out_spec,
        ),
        compiler_params=pltpu.CompilerParams(
            dimension_semantics=dims,
            vmem_limit_bytes=_VMEM_LIMIT),
    )(*inputs)


# ----------------------------------------------------------------------------
# Parameter init (deterministic, Glorot-uniform like GAT's reset_parameters)
# ----------------------------------------------------------------------------
def _glorot(key, shape, fan_in, fan_out):
    limit = jnp.sqrt(6.0 / (fan_in + fan_out))
    return jax.random.uniform(key, shape, jnp.float32, -limit, limit)


def init_gatv1ppi_params(key, dim_in, num_classes):
    ks = jax.random.split(key, 10)
    p = {}
    # Layer 0: dim_in -> 256, 4 heads, concat, elu
    p["W0"] = _glorot(ks[0], (4, dim_in, 256), dim_in, 256)
    p["as0"] = _glorot(ks[1], (4, 1, 256), 256, 1)
    p["ad0"] = _glorot(ks[2], (4, 1, 256), 256, 1)
    # Layer 1: 1024 -> 256, 4 heads, concat, elu, identity skip
    p["W1"] = _glorot(ks[3], (4, 1024, 256), 1024, 256)
    p["as1"] = _glorot(ks[4], (4, 1, 256), 256, 1)
    p["ad1"] = _glorot(ks[5], (4, 1, 256), 256, 1)
    # Layer 2: 1024 -> num_classes, 6 heads, avg, identity act, projection skip
    p["W2"] = _glorot(ks[6], (6, 1024, num_classes), 1024, num_classes)
    p["as2"] = _glorot(ks[7], (6, 1, num_classes), num_classes, 1)
    p["ad2"] = _glorot(ks[8], (6, 1, num_classes), num_classes, 1)
    p["Wskip2"] = _glorot(ks[9], (1024, num_classes), 1024, num_classes)
    return p


# ----------------------------------------------------------------------------
# Full GATv1PPI forward
# ----------------------------------------------------------------------------
def gatv1ppi_forward(params, x, edge_index, num_nodes):
    n = num_nodes
    tq = _ROW_TILE if n >= _ROW_TILE else _round_up(n, 8)
    n_pad = _round_up(n, tq)

    # Additive attention mask (0 = edge or self-loop, -1e9 = non-edge),
    # built ONCE and shared by all three layers.
    bias = jnp.full((n_pad, n_pad), _NEG_INF, jnp.float32)
    bias = bias.at[edge_index[1], edge_index[0]].set(0.0)   # src -> dst messages
    diag = jnp.arange(n_pad)
    bias = bias.at[diag, diag].set(0.0)                     # self loops

    x0 = jnp.pad(x.astype(jnp.float32), ((0, n_pad - n), (0, 0)))

    h0 = gat_layer(x0, bias, params["W0"], params["ad0"], params["as0"],
                   reduce="concat", act="elu", tq=tq)
    h1 = gat_layer(h0, bias, params["W1"], params["ad1"], params["as1"],
                   reduce="concat", act="elu", tq=tq, skip_x=h0)
    h2 = gat_layer(h1, bias, params["W2"], params["ad2"], params["as2"],
                   reduce="avg", act="identity", tq=tq)

    num_classes = params["W2"].shape[-1]
    # Layer-2 projection skip (plain-JAX glue), then slice off padding.
    out = h2[:n, :num_classes] + h1[:n] @ params["Wskip2"]
    return out


if __name__ == "__main__":
    key = jax.random.PRNGKey(0)
    kx, ke1, ke2, kp = jax.random.split(key, 4)

    N = 64            # number of graph nodes
    DIM_IN = 32       # input node-feature dim
    NUM_CLASSES = 8
    E = 256           # number of directed edges

    x = jax.random.normal(kx, (N, DIM_IN), jnp.float32)
    src = jax.random.randint(ke1, (E,), 0, N, dtype=jnp.int32)
    dst = jax.random.randint(ke2, (E,), 0, N, dtype=jnp.int32)
    edge_index = jnp.stack([src, dst])                    # (2, E)

    params = init_gatv1ppi_params(kp, DIM_IN, NUM_CLASSES)

    out = gatv1ppi_forward(params, x, edge_index, N)
    out = jax.block_until_ready(out)

    assert out.shape == (N, NUM_CLASSES), out.shape
    assert bool(jnp.all(jnp.isfinite(out)))
    print("KERNEL_OK")
</pallas_src>

<mosaic_0001>
module attributes {stable_mosaic.version = 11 : i64} {
  func.func @_proj_kernel(%arg0: i32, %arg1: memref<64x32xf32, #tpu.memory_space<vmem>>, %arg2: memref<32x1024xbf16, #tpu.memory_space<vmem>>, %arg3: memref<64x1024xbf16, #tpu.memory_space<vmem>>) attributes {dimension_semantics = [#tpu.dimension_semantics<parallel>], iteration_bounds = array<i64: 1>, scalar_prefetch = 0 : i64, scratch_operands = 0 : i64, tpu.core_type = #tpu.core_type<tc>, window_params = [{transform_indices = @transform_0, window_bounds = array<i64: 64, 32>}, {pipeline_mode = #tpu.pipeline_mode<synchronous>, transform_indices = @transform_1, window_bounds = array<i64: 32, 1024>}, {transform_indices = @transform_2, window_bounds = array<i64: 64, 1024>}]} {
    %c0 = arith.constant 0 : index
    %c0_0 = arith.constant 0 : index
    %0 = vector.load %arg1[%c0, %c0_0] : memref<64x32xf32, #tpu.memory_space<vmem>>, vector<64x32xf32>
    %1 = arith.truncf %0 : vector<64x32xf32> to vector<64x32xbf16>
    %c0_1 = arith.constant 0 : index
    %c0_2 = arith.constant 0 : index
    %2 = vector.load %arg2[%c0_1, %c0_2] : memref<32x1024xbf16, #tpu.memory_space<vmem>>, vector<32x1024xbf16>
    %cst = arith.constant dense<0.000000e+00> : vector<64x1024xf32>
    %3 = tpu.matmul %1, %2, %cst {dimension_numbers = #tpu.dot_dimension_numbers<[1], [0], [0], [1], [0, 0, 1, 1], [], []>} : vector<64x32xbf16>, vector<32x1024xbf16>, vector<64x1024xf32> -> vector<64x1024xf32>
    %4 = arith.truncf %3 : vector<64x1024xf32> to vector<64x1024xbf16>
    %c0_3 = arith.constant 0 : index
    %c0_4 = arith.constant 0 : index
    %5 = vector.load %arg3[%c0_3, %c0_4] : memref<64x1024xbf16, #tpu.memory_space<vmem>>, vector<64x1024xbf16>
    tpu.vector_store %arg3[%c0_3, %c0_4], %4 {strides = array<i32>} : memref<64x1024xbf16, #tpu.memory_space<vmem>>, vector<64x1024xbf16>,
    return
  }
  func.func @transform_0(%arg0: i32) -> (i32, i32) {
    %c0_i32 = arith.constant 0 : i32
    %c0_i32_0 = arith.constant 0 : i32
    return %arg0, %c0_i32 : i32, i32
  }
  func.func @transform_1(%arg0: i32) -> (i32, i32) {
    %c0_i32 = arith.constant 0 : i32
    %c0_i32_0 = arith.constant 0 : i32
    %c0_i32_1 = arith.constant 0 : i32
    return %c0_i32, %c0_i32_0 : i32, i32
  }
  func.func @transform_2(%arg0: i32) -> (i32, i32) {
    %c0_i32 = arith.constant 0 : i32
    %c0_i32_0 = arith.constant 0 : i32
    return %arg0, %c0_i32 : i32, i32
  }
}

</mosaic_0001>

<llo_original>
// kernel: tpu_custom_call.1
$region0: #{tpu_custom_call.1}
  #allocation0 [shape = 'u32[]', space=smem, size = 0x4, offset = 0x4, fixed_abs, tag = 'smem constant byte address 0x4 - core index']
  #allocation1 [shape = 'u32[144,128]{1,0:T(1,128)}', space=vmem, size = 0x12000, scoped, tag = 'internal scratch']
  %s0 = inlined_call_operand.vmem [shape: f32[64,32], index: 0, kind: input, shape index: {}]
  %s1 = inlined_call_operand.hbm [shape: bf16[32,1024], index: 1, kind: input, shape index: {}]
  %s2 = inlined_call_operand.hbm [shape: bf16[64,1024], index: 2, kind: output, shape index: {}]
  %s3 = sld [smem:[#allocation0]]
  $region22: #{tpu_custom_call.1} parent=0
    _
  %s5 = ssub.s32 1, %s3
  %s6 = scalar_select 0, %s5, %s3
  $region1: #{tpu_custom_call.1} parent=0
    #allocation2 [shape = 'u8[65536]{0}', space=vmem, size = 0x10000, scoped, tag = 'input window, operand 1, single buffered']
    #allocation3 [shape = 's32[1]{0}', space=sflag, size = 0x4, scoped, tag = 'scoped memory for tpu_custom_call.1']
    #allocation4 [shape = 's32[1]{0}', space=sflag, size = 0x4, scoped, tag = 'scoped memory for tpu_custom_call.1']
    #allocation5 [shape = 'u8[131072]{0}', space=vmem, size = 0x20000, scoped, tag = 'output window, operand 0, single buffered']
    %7 = vsyncpa [#allocation3], 0
    %8 = vsyncpa [#allocation4], 0
    // Predicated region
    $region2: #{tpu_custom_call.1} parent=1 // pred_check
      _
    $region3: #{tpu_custom_call.1} parent=1 // pred_check_branch
      %10 = sbr.rel (0) target = $region5
    $region4: #{tpu_custom_call.1} parent=1 // pred_region
      _
    $region5: #{tpu_custom_call.1} parent=1 // pred_fallthru
      _
    // Predicated region
    $region6: #{tpu_custom_call.1} parent=1 // pred_check
      _
    $region7: #{tpu_custom_call.1} parent=1 // pred_check_branch
      %12 = sbr.rel (0) target = $region9
    $region8: #{tpu_custom_call.1} parent=1 // pred_region
      %s14 = ssub.s32 2048, 2048
      %15 = vsyncadd [#allocation3], %s14
      %s16 = sshll.u32 [#allocation2], 4
      %s17 = int_to_ptr.vmem [resolvable:$true] %s16
      %22 = dma.hbm_to_vmem [thread:$0]  %s1, 2048, %s17, [#allocation3], 512, 512, 32
    $region9: #{tpu_custom_call.1} parent=1 // pred_fallthru
      _
    // Predicated region
    $region10: #{tpu_custom_call.1} parent=1 // pred_check
      _
    $region11: #{tpu_custom_call.1} parent=1 // pred_check_branch
      %24 = sbr.rel (0) target = $region13
    $region12: #{tpu_custom_call.1} parent=1 // pred_region
      %25 = dma.done [#allocation3], 2048
    $region13: #{tpu_custom_call.1} parent=1 // pred_fallthru
      _
    %v27 = vld [vmem:[%s0] sm:$0xff]
    %v28 = vld [vmem:[%s0 + $0x8] sm:$0xff]
    %v29 = vld [vmem:[%s0 + $0x10] sm:$0xff]
    %v30 = vld [vmem:[%s0 + $0x18] sm:$0xff]
    %v31 = vld [vmem:[%s0 + $0x20] sm:$0xff]
    %v32 = vld [vmem:[%s0 + $0x28] sm:$0xff]
    %v33 = vld [vmem:[%s0 + $0x30] sm:$0xff]
    %v34 = vld [vmem:[%s0 + $0x38] sm:$0xff]
    %v35 = vpack.c.bf16 %v28, %v27
    %v36 = vpack.c.bf16 %v30, %v29
    %v37 = vpack.c.bf16 %v32, %v31
    %v38 = vpack.c.bf16 %v34, %v33
    %v39 = vld [vmem:[#allocation2] sm:$0xff]
    %v40 = vld [vmem:[#allocation2 + $0x8] sm:$0xff]
    %v41 = vld [vmem:[#allocation2 + $0x10] sm:$0xff]
    %v42 = vld [vmem:[#allocation2 + $0x18] sm:$0xff]
    %v43 = vld [vmem:[#allocation2 + $0x20] sm:$0xff]
    %v44 = vld [vmem:[#allocation2 + $0x28] sm:$0xff]
    %v45 = vld [vmem:[#allocation2 + $0x30] sm:$0xff]
    %v46 = vld [vmem:[#allocation2 + $0x38] sm:$0xff]
    %v47 = vld [vmem:[#allocation2 + $0x40] sm:$0xff]
    %v48 = vld [vmem:[#allocation2 + $0x48] sm:$0xff]
    %v49 = vld [vmem:[#allocation2 + $0x50] sm:$0xff]
    %v50 = vld [vmem:[#allocation2 + $0x58] sm:$0xff]
    %v51 = vld [vmem:[#allocation2 + $0x60] sm:$0xff]
    %v52 = vld [vmem:[#allocation2 + $0x68] sm:$0xff]
    %v53 = vld [vmem:[#allocation2 + $0x70] sm:$0xff]
    %v54 = vld [vmem:[#allocation2 + $0x78] sm:$0xff]
    %v71 = vunpack.c.l.b16 %v39
    %v72 = vunpack.c.h.b16 %v39
    %v73 = vunpack.c.l.b16 %v40
    %v74 = vunpack.c.h.b16 %v40
    %v75 = vunpack.c.l.b16 %v41
    %v76 = vunpack.c.h.b16 %v41
    %v77 = vunpack.c.l.b16 %v42
    %v78 = vunpack.c.h.b16 %v42
    %v79 = vunpack.c.l.b16 %v43
    %v80 = vunpack.c.h.b16 %v43
    %v81 = vunpack.c.l.b16 %v44
    %v82 = vunpack.c.h.b16 %v44
    %v83 = vunpack.c.l.b16 %v45
    %v84 = vunpack.c.h.b16 %v45
    %v85 = vunpack.c.l.b16 %v46
    %v86 = vunpack.c.h.b16 %v46
    %v87 = vunpack.c.l.b16 %v47
    %v88 = vunpack.c.h.b16 %v47
    %v89 = vunpack.c.l.b16 %v48
    %v90 = vunpack.c.h.b16 %v48
    %v91 = vunpack.c.l.b16 %v49
    %v92 = vunpack.c.h.b16 %v49
    %v93 = vunpack.c.l.b16 %v50
    %v94 = vunpack.c.h.b16 %v50
    %v95 = vunpack.c.l.b16 %v51
    %v96 = vunpack.c.h.b16 %v51
    %v97 = vunpack.c.l.b16 %v52
    %v98 = vunpack.c.h.b16 %v52
    %v99 = vunpack.c.l.b16 %v53
    %v100 = vunpack.c.h.b16 %v53
    %v101 = vunpack.c.l.b16 %v54
    %v102 = vunpack.c.h.b16 %v54
    %v103 = vpack.c.b16 %v79, %v71
    %v104 = vpack.c.b16 %v80, %v72
    %v105 = vpack.c.b16 %v81, %v73
    %v106 = vpack.c.b16 %v82, %v74
    %v107 = vpack.c.b16 %v83, %v75
    %v108 = vpack.c.b16 %v84, %v76
    %v109 = vpack.c.b16 %v85, %v77
    %v110 = vpack.c.b16 %v86, %v78
    %v111 = vpack.c.b16 %v95, %v87
    %v112 = vpack.c.b16 %v96, %v88
    %v113 = vpack.c.b16 %v97, %v89
    %v114 = vpack.c.b16 %v98, %v90
    %v115 = vpack.c.b16 %v99, %v91
    %v116 = vpack.c.b16 %v100, %v92
    %v117 = vpack.c.b16 %v101, %v93
    %v118 = vpack.c.b16 %v102, %v94
    %vm135 = vcmask 261120
    %v137 = vsel %vm135, %v35, 0
    %v140 = vsel %vm135, %v36, 0
    %v143 = vsel %vm135, %v37, 0
    %v146 = vsel %vm135, %v38, 0
    %148 = vmatprep.subr.bf16.mxu0 0
    %149 = vmatpush1.bf16.msra.mxu0 0
    %150 = vmatprep.subr.bf16.mxu0 0
    %151 = vmatpush1.bf16.msra.mxu0 0
    %152 = vmatprep.subr.bf16.mxu0 0
    %153 = vmatpush1.bf16.msra.mxu0 0
    %154 = vmatprep.subr.bf16.mxu0 0
    %155 = vmatpush1.bf16.msra.mxu0 0
    %156 = vmatprep.subr.bf16.mxu0 0
    %157 = vmatpush1.bf16.msra.mxu0 0
    %158 = vmatprep.subr.bf16.mxu0 0
    %159 = vmatpush1.bf16.msra.mxu0 0
    %160 = vmatprep.subr.bf16.mxu0 %v112
    %161 = vmatpush1.bf16.msra.mxu0 %v111
    %162 = vmatprep.subr.bf16.mxu0 %v104
    %163 = vmatpush1.bf16.msra.mxu0 %v103
    %164 = vmatprep.subr.bf16.mxu0 0
    %165 = vmatpush2.bf16.msra.mxu0 0
    %166 = vmatprep.subr.bf16.mxu0 0
    %167 = vmatpush2.bf16.msra.mxu0 0
    %168 = vmatprep.subr.bf16.mxu0 0
    %169 = vmatpush2.bf16.msra.mxu0 0
    %170 = vmatprep.subr.bf16.mxu0 0
    %171 = vmatpush2.bf16.msra.mxu0 0
    %172 = vmatprep.subr.bf16.mxu0 0
    %173 = vmatpush2.bf16.msra.mxu0 0
    %174 = vmatprep.subr.bf16.mxu0 0
    %175 = vmatpush2.bf16.msra.mxu0 0
    %176 = vmatprep.subr.bf16.mxu0 0
    %177 = vmatpush2.bf16.msra.mxu0 0
    %178 = vmatprep.subr.bf16.mxu0 0
    %179 = vmatpush2.bf16.msra.mxu0 0
    %180 = vmatprep.mubr.bf16.mxu0 0
    %181 = vmatmul.mubr.bf16.gmra.mxu0 %v137
    %v182 = vpop.f32.mrf.mxu0
    %v183 = vadd.f32 0.0, %v182
    %v184 = vpop.f32.mrf.mxu0
    %v185 = vadd.f32 0.0, %v184
    %v186 = vpop.f32.mrf.mxu0
    %v187 = vadd.f32 0.0, %v186
    %v188 = vpop.f32.mrf.mxu0
    %v189 = vadd.f32 0.0, %v188
    %190 = vmatprep.mubr.bf16.mxu0 0
    %191 = vmatmul.mubr.bf16.gmra.mxu0 %v140
    %v192 = vpop.f32.mrf.mxu0
    %v193 = vadd.f32 0.0, %v192
    %v194 = vpop.f32.mrf.mxu0
    %v195 = vadd.f32 0.0, %v194
    %v196 = vpop.f32.mrf.mxu0
    %v197 = vadd.f32 0.0, %v196
    %v198 = vpop.f32.mrf.mxu0
    %v199 = vadd.f32 0.0, %v198
    %200 = vmatprep.mubr.bf16.mxu0 0
    %201 = vmatmul.mubr.bf16.gmra.mxu0 %v143
    %v202 = vpop.f32.mrf.mxu0
    %v203 = vadd.f32 0.0, %v202
    %v204 = vpop.f32.mrf.mxu0
    %v205 = vadd.f32 0.0, %v204
    %v206 = vpop.f32.mrf.mxu0
    %v207 = vadd.f32 0.0, %v206
    %v208 = vpop.f32.mrf.mxu0
    %v209 = vadd.f32 0.0, %v208
    %210 = vmatprep.mubr.bf16.mxu0 0
    %211 = vmatmul.mubr.bf16.gmra.mxu0 %v146
    %v212 = vpop.f32.mrf.mxu0
    %v213 = vadd.f32 0.0, %v212
    %v214 = vpop.f32.mrf.mxu0
    %v215 = vadd.f32 0.0, %v214
    %v216 = vpop.f32.mrf.mxu0
    %v217 = vadd.f32 0.0, %v216
    %v218 = vpop.f32.mrf.mxu0
    %v219 = vadd.f32 0.0, %v218
    %220 = vdwg.mxu0
    %221 = vmatprep.subr.bf16.mxu0 0
    %222 = vmatpush1.bf16.msra.mxu0 0
    %223 = vmatprep.subr.bf16.mxu0 0
    %224 = vmatpush1.bf16.msra.mxu0 0
    %225 = vmatprep.subr.bf16.mxu0 0
    %226 = vmatpush1.bf16.msra.mxu0 0
    %227 = vmatprep.subr.bf16.mxu0 0
    %228 = vmatpush1.bf16.msra.mxu0 0
    %229 = vmatprep.subr.bf16.mxu0 0
    %230 = vmatpush1.bf16.msra.mxu0 0
    %231 = vmatprep.subr.bf16.mxu0 0
    %232 = vmatpush1.bf16.msra.mxu0 0
    %233 = vmatprep.subr.bf16.mxu0 %v114
    %234 = vmatpush1.bf16.msra.mxu0 %v113
    %235 = vmatprep.subr.bf16.mxu0 %v106
    %236 = vmatpush1.bf16.msra.mxu0 %v105
    %237 = vmatprep.subr.bf16.mxu0 0
    %238 = vmatpush2.bf16.msra.mxu0 0
    %239 = vmatprep.subr.bf16.mxu0 0
    %240 = vmatpush2.bf16.msra.mxu0 0
    %241 = vmatprep.subr.bf16.mxu0 0
    %242 = vmatpush2.bf16.msra.mxu0 0
    %243 = vmatprep.subr.bf16.mxu0 0
    %244 = vmatpush2.bf16.msra.mxu0 0
    %245 = vmatprep.subr.bf16.mxu0 0
    %246 = vmatpush2.bf16.msra.mxu0 0
    %247 = vmatprep.subr.bf16.mxu0 0
    %248 = vmatpush2.bf16.msra.mxu0 0
    %249 = vmatprep.subr.bf16.mxu0 0
    %250 = vmatpush2.bf16.msra.mxu0 0
    %251 = vmatprep.subr.bf16.mxu0 0
    %252 = vmatpush2.bf16.msra.mxu0 0
    %253 = vmatprep.mubr.bf16.mxu0 0
    %254 = vmatmul.mubr.bf16.gmra.mxu0 %v137
    %v255 = vpop.f32.mrf.mxu0
    %v256 = vadd.f32 0.0, %v255
    %v257 = vpop.f32.mrf.mxu0
    %v258 = vadd.f32 0.0, %v257
    %v259 = vpop.f32.mrf.mxu0
    %v260 = vadd.f32 0.0, %v259
    %v261 = vpop.f32.mrf.mxu0
    %v262 = vadd.f32 0.0, %v261
    %263 = vmatprep.mubr.bf16.mxu0 0
    %264 = vmatmul.mubr.bf16.gmra.mxu0 %v140
    %v265 = vpop.f32.mrf.mxu0
    %v266 = vadd.f32 0.0, %v265
    %v267 = vpop.f32.mrf.mxu0
    %v268 = vadd.f32 0.0, %v267
    %v269 = vpop.f32.mrf.mxu0
    %v270 = vadd.f32 0.0, %v269
    %v271 = vpop.f32.mrf.mxu0
    %v272 = vadd.f32 0.0, %v271
    %273 = vmatprep.mubr.bf16.mxu0 0
    %274 = vmatmul.mubr.bf16.gmra.mxu0 %v143
    %v275 = vpop.f32.mrf.mxu0
    %v276 = vadd.f32 0.0, %v275
    %v277 = vpop.f32.mrf.mxu0
    %v278 = vadd.f32 0.0, %v277
    %v279 = vpop.f32.mrf.mxu0
    %v280 = vadd.f32 0.0, %v279
    %v281 = vpop.f32.mrf.mxu0
    %v282 = vadd.f32 0.0, %v281
    %283 = vmatprep.mubr.bf16.mxu0 0
    %284 = vmatmul.mubr.bf16.gmra.mxu0 %v146
    %v285 = vpop.f32.mrf.mxu0
    %v286 = vadd.f32 0.0, %v285
    %v287 = vpop.f32.mrf.mxu0
    %v288 = vadd.f32 0.0, %v287
    %v289 = vpop.f32.mrf.mxu0
    %v290 = vadd.f32 0.0, %v289
    %v291 = vpop.f32.mrf.mxu0
    %v292 = vadd.f32 0.0, %v291
    %293 = vdwg.mxu0
    %294 = vmatprep.subr.bf16.mxu0 0
    %295 = vmatpush1.bf16.msra.mxu0 0
    %296 = vmatprep.subr.bf16.mxu0 0
    %297 = vmatpush1.bf16.msra.mxu0 0
    %298 = vmatprep.subr.bf16.mxu0 0
    %299 = vmatpush1.bf16.msra.mxu0 0
    %300 = vmatprep.subr.bf16.mxu0 0
    %301 = vmatpush1.bf16.msra.mxu0 0
    %302 = vmatprep.subr.bf16.mxu0 0
    %303 = vmatpush1.bf16.msra.mxu0 0
    %304 = vmatprep.subr.bf16.mxu0 0
    %305 = vmatpush1.bf16.msra.mxu0 0
    %306 = vmatprep.subr.bf16.mxu0 %v116
    %307 = vmatpush1.bf16.msra.mxu0 %v115
    %308 = vmatprep.subr.bf16.mxu0 %v108
    %309 = vmatpush1.bf16.msra.mxu0 %v107
    %310 = vmatprep.subr.bf16.mxu0 0
    %311 = vmatpush2.bf16.msra.mxu0 0
    %312 = vmatprep.subr.bf16.mxu0 0
    %313 = vmatpush2.bf16.msra.mxu0 0
    %314 = vmatprep.subr.bf16.mxu0 0
    %315 = vmatpush2.bf16.msra.mxu0 0
    %316 = vmatprep.subr.bf16.mxu0 0
    %317 = vmatpush2.bf16.msra.mxu0 0
    %318 = vmatprep.subr.bf16.mxu0 0
    %319 = vmatpush2.bf16.msra.mxu0 0
    %320 = vmatprep.subr.bf16.mxu0 0
    %321 = vmatpush2.bf16.msra.mxu0 0
    %322 = vmatprep.subr.bf16.mxu0 0
    %323 = vmatpush2.bf16.msra.mxu0 0
    %324 = vmatprep.subr.bf16.mxu0 0
    %325 = vmatpush2.bf16.msra.mxu0 0
    %326 = vmatprep.mubr.bf16.mxu0 0
    %327 = vmatmul.mubr.bf16.gmra.mxu0 %v137
    %v328 = vpop.f32.mrf.mxu0
    %v329 = vadd.f32 0.0, %v328
    %v330 = vpop.f32.mrf.mxu0
    %v331 = vadd.f32 0.0, %v330
    %v332 = vpop.f32.mrf.mxu0
    %v333 = vadd.f32 0.0, %v332
    %v334 = vpop.f32.mrf.mxu0
    %v335 = vadd.f32 0.0, %v334
    %336 = vmatprep.mubr.bf16.mxu0 0
    %337 = vmatmul.mubr.bf16.gmra.mxu0 %v140
    %v338 = vpop.f32.mrf.mxu0
    %v339 = vadd.f32 0.0, %v338
    %v340 = vpop.f32.mrf.mxu0
    %v341 = vadd.f32 0.0, %v340
    %v342 = vpop.f32.mrf.mxu0
    %v343 = vadd.f32 0.0, %v342
    %v344 = vpop.f32.mrf.mxu0
    %v345 = vadd.f32 0.0, %v344
    %346 = vmatprep.mubr.bf16.mxu0 0
    %347 = vmatmul.mubr.bf16.gmra.mxu0 %v143
    %v348 = vpop.f32.mrf.mxu0
    %v349 = vadd.f32 0.0, %v348
    %v350 = vpop.f32.mrf.mxu0
    %v351 = vadd.f32 0.0, %v350
    %v352 = vpop.f32.mrf.mxu0
    %v353 = vadd.f32 0.0, %v352
    %v354 = vpop.f32.mrf.mxu0
    %v355 = vadd.f32 0.0, %v354
    %356 = vmatprep.mubr.bf16.mxu0 0
    %357 = vmatmul.mubr.bf16.gmra.mxu0 %v146
    %v358 = vpop.f32.mrf.mxu0
    %v359 = vadd.f32 0.0, %v358
    %v360 = vpop.f32.mrf.mxu0
    %v361 = vadd.f32 0.0, %v360
    %v362 = vpop.f32.mrf.mxu0
    %v363 = vadd.f32 0.0, %v362
    %v364 = vpop.f32.mrf.mxu0
    %v365 = vadd.f32 0.0, %v364
    %366 = vdwg.mxu0
    %367 = vmatprep.subr.bf16.mxu0 0
    %368 = vmatpush1.bf16.msra.mxu0 0
    %369 = vmatprep.subr.bf16.mxu0 0
    %370 = vmatpush1.bf16.msra.mxu0 0
    %371 = vmatprep.subr.bf16.mxu0 0
    %372 = vmatpush1.bf16.msra.mxu0 0
    %373 = vmatprep.subr.bf16.mxu0 0
    %374 = vmatpush1.bf16.msra.mxu0 0
    %375 = vmatprep.subr.bf16.mxu0 0
    %376 = vmatpush1.bf16.msra.mxu0 0
    %377 = vmatprep.subr.bf16.mxu0 0
    %378 = vmatpush1.bf16.msra.mxu0 0
    %379 = vmatprep.subr.bf16.mxu0 %v118
    %380 = vmatpush1.bf16.msra.mxu0 %v117
    %381 = vmatprep.subr.bf16.mxu0 %v110
    %382 = vmatpush1.bf16.msra.mxu0 %v109
    %383 = vmatprep.subr.bf16.mxu0 0
    %384 = vmatpush2.bf16.msra.mxu0 0
    %385 = vmatprep.subr.bf16.mxu0 0
    %386 = vmatpush2.bf16.msra.mxu0 0
    %387 = vmatprep.subr.bf16.mxu0 0
    %388 = vmatpush2.bf16.msra.mxu0 0
    %389 = vmatprep.subr.bf16.mxu0 0
    %390 = vmatpush2.bf16.msra.mxu0 0
    %391 = vmatprep.subr.bf16.mxu0 0
    %392 = vmatpush2.bf16.msra.mxu0 0
    %393 = vmatprep.subr.bf16.mxu0 0
    %394 = vmatpush2.bf16.msra.mxu0 0
    %395 = vmatprep.subr.bf16.mxu0 0
    %396 = vmatpush2.bf16.msra.mxu0 0
    %397 = vmatprep.subr.bf16.mxu0 0
    %398 = vmatpush2.bf16.msra.mxu0 0
    %399 = vmatprep.mubr.bf16.mxu0 0
    %400 = vmatmul.mubr.bf16.gmra.mxu0 %v137
    %v401 = vpop.f32.mrf.mxu0
    %v402 = vadd.f32 0.0, %v401
    %v403 = vpop.f32.mrf.mxu0
    %v404 = vadd.f32 0.0, %v403
    %v405 = vpop.f32.mrf.mxu0
    %v406 = vadd.f32 0.0, %v405
    %v407 = vpop.f32.mrf.mxu0
    %v408 = vadd.f32 0.0, %v407
    %409 = vmatprep.mubr.bf16.mxu0 0
    %410 = vmatmul.mubr.bf16.gmra.mxu0 %v140
    %v411 = vpop.f32.mrf.mxu0
    %v412 = vadd.f32 0.0, %v411
    %v413 = vpop.f32.mrf.mxu0
    %v414 = vadd.f32 0.0, %v413
    %v415 = vpop.f32.mrf.mxu0
    %v416 = vadd.f32 0.0, %v415
    %v417 = vpop.f32.mrf.mxu0
    %v418 = vadd.f32 0.0, %v417
    %419 = vmatprep.mubr.bf16.mxu0 0
    %420 = vmatmul.mubr.bf16.gmra.mxu0 %v143
    %v421 = vpop.f32.mrf.mxu0
    %v422 = vadd.f32 0.0, %v421
    %v423 = vpop.f32.mrf.mxu0
    %v424 = vadd.f32 0.0, %v423
    %v425 = vpop.f32.mrf.mxu0
    %v426 = vadd.f32 0.0, %v425
    %v427 = vpop.f32.mrf.mxu0
    %v428 = vadd.f32 0.0, %v427
    %429 = vmatprep.mubr.bf16.mxu0 0
    %430 = vmatmul.mubr.bf16.gmra.mxu0 %v146
    %v431 = vpop.f32.mrf.mxu0
    %v432 = vadd.f32 0.0, %v431
    %v433 = vpop.f32.mrf.mxu0
    %v434 = vadd.f32 0.0, %v433
    %v435 = vpop.f32.mrf.mxu0
    %v436 = vadd.f32 0.0, %v435
    %v437 = vpop.f32.mrf.mxu0
    %v438 = vadd.f32 0.0, %v437
    %439 = vdwg.mxu0
    %v440 = vpack.c.bf16 %v187, %v183
    %v441 = vpack.c.bf16 %v189, %v185
    %v442 = vpack.c.bf16 %v260, %v256
    %v443 = vpack.c.bf16 %v262, %v258
    %v444 = vpack.c.bf16 %v333, %v329
    %v445 = vpack.c.bf16 %v335, %v331
    %v446 = vpack.c.bf16 %v406, %v402
    %v447 = vpack.c.bf16 %v408, %v404
    %v448 = vpack.c.bf16 %v197, %v193
    %v449 = vpack.c.bf16 %v199, %v195
    %v450 = vpack.c.bf16 %v270, %v266
    %v451 = vpack.c.bf16 %v272, %v268
    %v452 = vpack.c.bf16 %v343, %v339
    %v453 = vpack.c.bf16 %v345, %v341
    %v454 = vpack.c.bf16 %v416, %v412
    %v455 = vpack.c.bf16 %v418, %v414
    %v456 = vpack.c.bf16 %v207, %v203
    %v457 = vpack.c.bf16 %v209, %v205
    %v458 = vpack.c.bf16 %v280, %v276
    %v459 = vpack.c.bf16 %v282, %v278
    %v460 = vpack.c.bf16 %v353, %v349
    %v461 = vpack.c.bf16 %v355, %v351
    %v462 = vpack.c.bf16 %v426, %v422
    %v463 = vpack.c.bf16 %v428, %v424
    %v464 = vpack.c.bf16 %v217, %v213
    %v465 = vpack.c.bf16 %v219, %v215
    %v466 = vpack.c.bf16 %v290, %v286
    %v467 = vpack.c.bf16 %v292, %v288
    %v468 = vpack.c.bf16 %v363, %v359
    %v469 = vpack.c.bf16 %v365, %v361
    %v470 = vpack.c.bf16 %v436, %v432
    %v471 = vpack.c.bf16 %v438, %v434
    %v504 = vunpack.c.l.b16 %v440
    %v505 = vunpack.c.l.b16 %v441
    %v506 = vunpack.c.l.b16 %v442
    %v507 = vunpack.c.l.b16 %v443
    %v508 = vunpack.c.l.b16 %v444
    %v509 = vunpack.c.l.b16 %v445
    %v510 = vunpack.c.l.b16 %v446
    %v511 = vunpack.c.l.b16 %v447
    %v512 = vunpack.c.h.b16 %v440
    %v513 = vunpack.c.h.b16 %v441
    %v514 = vunpack.c.h.b16 %v442
    %v515 = vunpack.c.h.b16 %v443
    %v516 = vunpack.c.h.b16 %v444
    %v517 = vunpack.c.h.b16 %v445
    %v518 = vunpack.c.h.b16 %v446
    %v519 = vunpack.c.h.b16 %v447
    %v520 = vunpack.c.l.b16 %v448
    %v521 = vunpack.c.l.b16 %v449
    %v522 = vunpack.c.l.b16 %v450
    %v523 = vunpack.c.l.b16 %v451
    %v524 = vunpack.c.l.b16 %v452
    %v525 = vunpack.c.l.b16 %v453
    %v526 = vunpack.c.l.b16 %v454
    %v527 = vunpack.c.l.b16 %v455
    %v528 = vunpack.c.h.b16 %v448
    %v529 = vunpack.c.h.b16 %v449
    %v530 = vunpack.c.h.b16 %v450
    %v531 = vunpack.c.h.b16 %v451
    %v532 = vunpack.c.h.b16 %v452
    %v533 = vunpack.c.h.b16 %v453
    %v534 = vunpack.c.h.b16 %v454
    %v535 = vunpack.c.h.b16 %v455
    %v536 = vunpack.c.l.b16 %v456
    %v537 = vunpack.c.l.b16 %v457
    %v538 = vunpack.c.l.b16 %v458
    %v539 = vunpack.c.l.b16 %v459
    %v540 = vunpack.c.l.b16 %v460
    %v541 = vunpack.c.l.b16 %v461
    %v542 = vunpack.c.l.b16 %v462
    %v543 = vunpack.c.l.b16 %v463
    %v544 = vunpack.c.h.b16 %v456
    %v545 = vunpack.c.h.b16 %v457
    %v546 = vunpack.c.h.b16 %v458
    %v547 = vunpack.c.h.b16 %v459
    %v548 = vunpack.c.h.b16 %v460
    %v549 = vunpack.c.h.b16 %v461
    %v550 = vunpack.c.h.b16 %v462
    %v551 = vunpack.c.h.b16 %v463
    %v552 = vunpack.c.l.b16 %v464
    %v553 = vunpack.c.l.b16 %v465
    %v554 = vunpack.c.l.b16 %v466
    %v555 = vunpack.c.l.b16 %v467
    %v556 = vunpack.c.l.b16 %v468
    %v557 = vunpack.c.l.b16 %v469
    %v558 = vunpack.c.l.b16 %v470
    %v559 = vunpack.c.l.b16 %v471
    %v560 = vunpack.c.h.b16 %v464
    %v561 = vunpack.c.h.b16 %v465
    %v562 = vunpack.c.h.b16 %v466
    %v563 = vunpack.c.h.b16 %v467
    %v564 = vunpack.c.h.b16 %v468
    %v565 = vunpack.c.h.b16 %v469
    %v566 = vunpack.c.h.b16 %v470
    %v567 = vunpack.c.h.b16 %v471
    %v568 = vpack.c.b16 %v505, %v504
    %v569 = vpack.c.b16 %v507, %v506
    %v570 = vpack.c.b16 %v509, %v508
    %v571 = vpack.c.b16 %v511, %v510
    %v572 = vpack.c.b16 %v513, %v512
    %v573 = vpack.c.b16 %v515, %v514
    %v574 = vpack.c.b16 %v517, %v516
    %v575 = vpack.c.b16 %v519, %v518
    %v576 = vpack.c.b16 %v521, %v520
    %v577 = vpack.c.b16 %v523, %v522
    %v578 = vpack.c.b16 %v525, %v524
    %v579 = vpack.c.b16 %v527, %v526
    %v580 = vpack.c.b16 %v529, %v528
    %v581 = vpack.c.b16 %v531, %v530
    %v582 = vpack.c.b16 %v533, %v532
    %v583 = vpack.c.b16 %v535, %v534
    %v584 = vpack.c.b16 %v537, %v536
    %v585 = vpack.c.b16 %v539, %v538
    %v586 = vpack.c.b16 %v541, %v540
    %v587 = vpack.c.b16 %v543, %v542
    %v588 = vpack.c.b16 %v545, %v544
    %v589 = vpack.c.b16 %v547, %v546
    %v590 = vpack.c.b16 %v549, %v548
    %v591 = vpack.c.b16 %v551, %v550
    %v592 = vpack.c.b16 %v553, %v552
    %v593 = vpack.c.b16 %v555, %v554
    %v594 = vpack.c.b16 %v557, %v556
    %v595 = vpack.c.b16 %v559, %v558
    %v596 = vpack.c.b16 %v561, %v560
    %v597 = vpack.c.b16 %v563, %v562
    %v598 = vpack.c.b16 %v565, %v564
    %v599 = vpack.c.b16 %v567, %v566
    %632 = vst [vmem:[#allocation5] sm:$0xff] %v568
    %633 = vst [vmem:[#allocation5 + $0x8] sm:$0xff] %v569
    %634 = vst [vmem:[#allocation5 + $0x10] sm:$0xff] %v570
    %635 = vst [vmem:[#allocation5 + $0x18] sm:$0xff] %v571
    %636 = vst [vmem:[#allocation5 + $0x20] sm:$0xff] %v572
    %637 = vst [vmem:[#allocation5 + $0x28] sm:$0xff] %v573
    %638 = vst [vmem:[#allocation5 + $0x30] sm:$0xff] %v574
    %639 = vst [vmem:[#allocation5 + $0x38] sm:$0xff] %v575
    %640 = vst [vmem:[#allocation5 + $0x40] sm:$0xff] %v576
    %641 = vst [vmem:[#allocation5 + $0x48] sm:$0xff] %v577
    %642 = vst [vmem:[#allocation5 + $0x50] sm:$0xff] %v578
    %643 = vst [vmem:[#allocation5 + $0x58] sm:$0xff] %v579
    %644 = vst [vmem:[#allocation5 + $0x60] sm:$0xff] %v580
    %645 = vst [vmem:[#allocation5 + $0x68] sm:$0xff] %v581
    %646 = vst [vmem:[#allocation5 + $0x70] sm:$0xff] %v582
    %647 = vst [vmem:[#allocation5 + $0x78] sm:$0xff] %v583
    %648 = vst [vmem:[#allocation5 + $0x80] sm:$0xff] %v584
    %649 = vst [vmem:[#allocation5 + $0x88] sm:$0xff] %v585
    %650 = vst [vmem:[#allocation5 + $0x90] sm:$0xff] %v586
    %651 = vst [vmem:[#allocation5 + $0x98] sm:$0xff] %v587
    %652 = vst [vmem:[#allocation5 + $0xa0] sm:$0xff] %v588
    %653 = vst [vmem:[#allocation5 + $0xa8] sm:$0xff] %v589
    %654 = vst [vmem:[#allocation5 + $0xb0] sm:$0xff] %v590
    %655 = vst [vmem:[#allocation5 + $0xb8] sm:$0xff] %v591
    %656 = vst [vmem:[#allocation5 + $0xc0] sm:$0xff] %v592
    %657 = vst [vmem:[#allocation5 + $0xc8] sm:$0xff] %v593
    %658 = vst [vmem:[#allocation5 + $0xd0] sm:$0xff] %v594
    %659 = vst [vmem:[#allocation5 + $0xd8] sm:$0xff] %v595
    %660 = vst [vmem:[#allocation5 + $0xe0] sm:$0xff] %v596
    %661 = vst [vmem:[#allocation5 + $0xe8] sm:$0xff] %v597
    %662 = vst [vmem:[#allocation5 + $0xf0] sm:$0xff] %v598
    %663 = vst [vmem:[#allocation5 + $0xf8] sm:$0xff] %v599
    // Predicated region
    $region14: #{tpu_custom_call.1} parent=1 // pred_check
      _
    $region15: #{tpu_custom_call.1} parent=1 // pred_check_branch
      %665 = sbr.rel (0) target = $region17
    $region16: #{tpu_custom_call.1} parent=1 // pred_region
      %s667 = ssub.s32 4096, 4096
      %668 = vsyncadd [#allocation4], %s667
      %s669 = sshll.u32 [#allocation5], 4
      %s670 = int_to_ptr.vmem [resolvable:$true] %s669
      %675 = dma.vmem_to_hbm [thread:$0]  %s670, 4096, %s2, [#allocation4], 512, 512, 32
    $region17: #{tpu_custom_call.1} parent=1 // pred_fallthru
      _
    // Predicated region
    $region18: #{tpu_custom_call.1} parent=1 // pred_check
      _
    $region19: #{tpu_custom_call.1} parent=1 // pred_check_branch
      %677 = sbr.rel (0) target = $region21
    $region20: #{tpu_custom_call.1} parent=1 // pred_region
      %678 = dma.done [#allocation4], 4096
    $region21: #{tpu_custom_call.1} parent=1 // pred_fallthru
      _
    %679 = vsyncpa [#allocation3], 1
    %680 = vsyncpa [#allocation4], 1

</llo_original>
